<compile_context>
chip_gen: v7x
topology: tpu7x:2x2x1
jax: 0.10.0
libtpu: 0.0.40
codegen_flags: <defaults>
</compile_context>

<pallas_src>
import jax
import jax.numpy as jnp
from jax.experimental import pallas as pl
from jax.experimental.pallas import tpu as pltpu


def _attention_kernel(enc_ref, att_ref, we_ref, wa_ref, v_ref, out_ref):
    """One grid step processes a TILE_B chunk of the batch.

    enc_ref : (TILE_B, E)     encoder hidden states for this batch tile
    att_ref : (TILE_B*M, A)   attention inputs, flattened batch-major
    we_ref  : (E, H)          weight slice acting on enc_hidden
    wa_ref  : (A, H)          weight slice acting on att_input
    v_ref   : (1, H)          scoring vector (row layout; VPU/XLU path, f32)
    out_ref : (TILE_B, M)     softmax weights, lane-dense over M
    """
    tile_b, num_m = out_ref.shape

    att = att_ref[...]                 # (TILE_B*M, A)
    enc = enc_ref[...]                 # (TILE_B, E)
    wa = wa_ref[...]                   # (A, H)
    we = we_ref[...]                   # (E, H)
    v_row = v_ref[...]                 # (1, H), f32

    # One large MXU matmul over the whole batch tile; f32 accumulation.
    proj_a = jnp.dot(att, wa, preferred_element_type=jnp.float32)   # (TILE_B*M, H)
    # Encoder projection computed once per batch row, broadcast over M below.
    proj_e = jnp.dot(enc, we, preferred_element_type=jnp.float32)   # (TILE_B, H)

    # energy = tanh([s ; att] @ W_attn.T) == tanh(att@W_a + enc@W_e broadcast)
    energy = jnp.tanh(proj_a.reshape(tile_b, num_m, -1)
                      + proj_e[:, None, :])                          # (TILE_B, M, H)

    # energy @ v would be an N=1 MXU matmul (1 of 128 output lanes useful);
    # use a VPU multiply + lane (XLU) reduction instead.
    score = jnp.sum(energy * v_row[None, :, :], axis=-1)             # (TILE_B, M)

    # Softmax over M (the lane axis); EUP reciprocal instead of a VALU divide.
    s_max = jnp.max(score, axis=-1, keepdims=True)
    e = jnp.exp(score - s_max)
    denom = jnp.sum(e, axis=-1, keepdims=True)
    out_ref[...] = (e * pl.reciprocal(denom, approx=True)).astype(out_ref.dtype)


def attention_forward(enc_hidden, att_input, w_attn, w_v, *,
                      tile_b=None, matmul_dtype=None, vmem_limit_bytes=None):
    """enc_hidden: (B, E), att_input: (B, M, A),
    w_attn: (H, E+A) [torch Linear weight], w_v: (1, H) [torch Linear weight].

    tile_b        : batch rows per grid step (defaults to >=2 parallel blocks
                    when B is large enough, capped at 128 rows — re-derive /
                    lower for v7x's 64 MiB VMEM if M*A is huge).
    matmul_dtype  : e.g. jnp.bfloat16 to halve HBM bytes of the MXU operands
                    on v6e/v7x; elementwise math always stays in f32.
    vmem_limit_bytes : raise the scoped-VMEM limit (needed on v5e's 16 MiB
                    default if tile_b is pushed very high).
    """
    B, E = enc_hidden.shape
    _, M, A = att_input.shape
    H = w_attn.shape[0]

    # --- pick a batch tile: multiple of 8 (sublane rule) unless it spans B ---
    if tile_b is None:
        # At least two parallel grid blocks when possible (dual-TC v7x),
        # each a multiple of 8, capped at 128 batch rows per block.
        tile_b = B if B <= 8 else min(128, max(8, ((B // 2) // 8) * 8))
    tile_b = min(tile_b, B)
    if tile_b != B:
        tile_b = (tile_b // 8) * 8
        if tile_b == 0:
            tile_b = B

    dtype = matmul_dtype if matmul_dtype is not None else enc_hidden.dtype

    # Glue: split the concat-Linear weight and transpose for right-multiply.
    we = jnp.asarray(w_attn[:, :E].T, dtype)        # (E, H) -- acts on enc_hidden
    wa = jnp.asarray(w_attn[:, E:].T, dtype)        # (A, H) -- acts on att_input
    v_row = jnp.asarray(w_v, jnp.float32)           # (1, H) -- VPU path, keep f32
    att2d = att_input.reshape(B * M, A).astype(dtype)
    enc2d = enc_hidden.astype(dtype)

    grid = (pl.cdiv(B, tile_b),)

    out = pl.pallas_call(
        _attention_kernel,
        out_shape=jax.ShapeDtypeStruct((B, M), jnp.float32),
        grid_spec=pltpu.PrefetchScalarGridSpec(
            num_scalar_prefetch=0,
            grid=grid,
            in_specs=[
                pl.BlockSpec((tile_b, E), lambda b: (b, 0)),        # enc tile
                pl.BlockSpec((tile_b * M, A), lambda b: (b, 0)),    # att tile (flat)
                pl.BlockSpec((E, H), lambda b: (0, 0)),             # W_e (resident)
                pl.BlockSpec((A, H), lambda b: (0, 0)),             # W_a (resident)
                pl.BlockSpec((1, H), lambda b: (0, 0)),             # v row (resident)
            ],
            out_specs=pl.BlockSpec((tile_b, M), lambda b: (b, 0)),  # lane-dense (B, M)
        ),
        compiler_params=pltpu.CompilerParams(
            dimension_semantics=("parallel",),
            vmem_limit_bytes=vmem_limit_bytes),
    )(enc2d, att2d, we, wa, v_row)

    return out                                       # (B, M)


if __name__ == "__main__":
    key = jax.random.PRNGKey(0)
    B, M = 16, 8                # batch, number of "actions" (softmax axis)
    E, A, H = 32, 32, 32        # enc_hid_dim, att_input_dim, att_hid_dim

    k1, k2, k3, k4 = jax.random.split(key, 4)
    enc_hidden = jax.random.normal(k1, (B, E), jnp.float32)
    att_input = jax.random.normal(k2, (B, M, A), jnp.float32)

    # Deterministic parameter init (matches nn.Linear shapes).
    bound_attn = 1.0 / jnp.sqrt(jnp.float32(E + A))
    w_attn = jax.random.uniform(k3, (H, E + A), jnp.float32, -bound_attn, bound_attn)
    bound_v = 1.0 / jnp.sqrt(jnp.float32(H))
    w_v = jax.random.uniform(k4, (1, H), jnp.float32, -bound_v, bound_v)

    # Pure-JAX reference (mirrors the PyTorch forward exactly).
    s = jnp.broadcast_to(enc_hidden[:, None, :], (B, M, E))
    cat = jnp.concatenate([s, att_input], axis=2)
    energy = jnp.tanh(cat @ w_attn.T)
    att_w = (energy @ w_v.T)[..., 0]
    ref = jax.nn.softmax(att_w, axis=1)

    # Default tiling: 2 parallel batch blocks of 8 rows each (grid=(2,)).
    out = attention_forward(enc_hidden, att_input, w_attn, w_v)
    jax.block_until_ready(out)
    assert out.shape == (B, M)
    # Tolerance loosened vs 1e-5 only because of pl.reciprocal(approx=True).
    assert jnp.allclose(out, ref, atol=2e-3, rtol=2e-3), "mismatch vs reference (tiled)"

    # Single-block grid (whole batch in one step) — same semantics.
    out_full = attention_forward(enc_hidden, att_input, w_attn, w_v, tile_b=B)
    jax.block_until_ready(out_full)
    assert jnp.allclose(out_full, ref, atol=2e-3, rtol=2e-3), "mismatch vs reference (full)"

    # TODO(synk): for production on v6e/v7x, pass matmul_dtype=jnp.bfloat16 to
    # halve HBM traffic of the MXU operands (kept f32 here to match the tight
    # reference tolerance of the demo).
    print("KERNEL_OK")
</pallas_src>

<mosaic_0001>
module attributes {stable_mosaic.version = 11 : i64} {
  func.func @_attention_kernel(%arg0: i32, %arg1: memref<8x32xf32, #tpu.memory_space<vmem>>, %arg2: memref<64x32xf32, #tpu.memory_space<vmem>>, %arg3: memref<32x32xf32, #tpu.memory_space<vmem>>, %arg4: memref<32x32xf32, #tpu.memory_space<vmem>>, %arg5: memref<1x32xf32, #tpu.memory_space<vmem>>, %arg6: memref<8x8xf32, #tpu.memory_space<vmem>>) attributes {dimension_semantics = [#tpu.dimension_semantics<parallel>], iteration_bounds = array<i64: 2>, scalar_prefetch = 0 : i64, scratch_operands = 0 : i64, tpu.core_type = #tpu.core_type<tc>, window_params = [{transform_indices = @transform_0, window_bounds = array<i64: 8, 32>}, {transform_indices = @transform_1, window_bounds = array<i64: 64, 32>}, {pipeline_mode = #tpu.pipeline_mode<synchronous>, transform_indices = @transform_2, window_bounds = array<i64: 32, 32>}, {pipeline_mode = #tpu.pipeline_mode<synchronous>, transform_indices = @transform_3, window_bounds = array<i64: 32, 32>}, {pipeline_mode = #tpu.pipeline_mode<synchronous>, transform_indices = @transform_4, window_bounds = array<i64: 1, 32>}, {transform_indices = @transform_5, window_bounds = array<i64: 8, 8>}]} {
    %c0 = arith.constant 0 : index
    %c0_0 = arith.constant 0 : index
    %0 = vector.load %arg2[%c0, %c0_0] : memref<64x32xf32, #tpu.memory_space<vmem>>, vector<64x32xf32>
    %c0_1 = arith.constant 0 : index
    %c0_2 = arith.constant 0 : index
    %1 = vector.load %arg1[%c0_1, %c0_2] : memref<8x32xf32, #tpu.memory_space<vmem>>, vector<8x32xf32>
    %c0_3 = arith.constant 0 : index
    %c0_4 = arith.constant 0 : index
    %2 = vector.load %arg4[%c0_3, %c0_4] : memref<32x32xf32, #tpu.memory_space<vmem>>, vector<32x32xf32>
    %c0_5 = arith.constant 0 : index
    %c0_6 = arith.constant 0 : index
    %3 = vector.load %arg3[%c0_5, %c0_6] : memref<32x32xf32, #tpu.memory_space<vmem>>, vector<32x32xf32>
    %c0_7 = arith.constant 0 : index
    %c0_8 = arith.constant 0 : index
    %4 = vector.load %arg5[%c0_7, %c0_8] : memref<1x32xf32, #tpu.memory_space<vmem>>, vector<1x32xf32>
    %cst = arith.constant dense<0.000000e+00> : vector<64x32xf32>
    %5 = tpu.matmul %0, %2, %cst {dimension_numbers = #tpu.dot_dimension_numbers<[1], [0], [0], [1], [0, 0, 1, 1], [], []>} : vector<64x32xf32>, vector<32x32xf32>, vector<64x32xf32> -> vector<64x32xf32>
    %cst_9 = arith.constant dense<0.000000e+00> : vector<8x32xf32>
    %6 = tpu.matmul %1, %3, %cst_9 {dimension_numbers = #tpu.dot_dimension_numbers<[1], [0], [0], [1], [0, 0, 1, 1], [], []>} : vector<8x32xf32>, vector<32x32xf32>, vector<8x32xf32> -> vector<8x32xf32>
    %7 = vector.shape_cast %5 : vector<64x32xf32> to vector<8x8x32xf32>
    %8 = vector.shape_cast %6 : vector<8x32xf32> to vector<8x1x32xf32>
    %9 = vector.broadcast %8 : vector<8x1x32xf32> to vector<8x8x32xf32>
    %10 = arith.addf %7, %9 : vector<8x8x32xf32>
    %11 = math.tanh %10 : vector<8x8x32xf32>
    %12 = vector.shape_cast %4 : vector<1x32xf32> to vector<1x1x32xf32>
    %13 = vector.broadcast %12 : vector<1x1x32xf32> to vector<8x8x32xf32>
    %14 = arith.mulf %11, %13 : vector<8x8x32xf32>
    %cst_10 = arith.constant dense<0.000000e+00> : vector<8x8xf32>
    %15 = vector.multi_reduction <add>, %14, %cst_10 [2] : vector<8x8x32xf32> to vector<8x8xf32>
    %cst_11 = arith.constant dense<0xFF800000> : vector<8xf32>
    %16 = vector.multi_reduction <maximumf>, %15, %cst_11 [1] : vector<8x8xf32> to vector<8xf32>
    %17 = vector.shape_cast %16 : vector<8xf32> to vector<8x1xf32>
    %18 = vector.broadcast %17 : vector<8x1xf32> to vector<8x8xf32>
    %19 = arith.subf %15, %18 : vector<8x8xf32>
    %20 = math.exp %19 : vector<8x8xf32>
    %cst_12 = arith.constant dense<0.000000e+00> : vector<8xf32>
    %21 = vector.multi_reduction <add>, %20, %cst_12 [1] : vector<8x8xf32> to vector<8xf32>
    %22 = vector.shape_cast %21 : vector<8xf32> to vector<8x1xf32>
    %23 = tpu.reciprocal %22 {approx = true} : vector<8x1xf32> -> vector<8x1xf32>
    %24 = vector.broadcast %23 : vector<8x1xf32> to vector<8x8xf32>
    %25 = arith.mulf %20, %24 : vector<8x8xf32>
    %c0_13 = arith.constant 0 : index
    %c0_14 = arith.constant 0 : index
    %26 = vector.load %arg6[%c0_13, %c0_14] : memref<8x8xf32, #tpu.memory_space<vmem>>, vector<8x8xf32>
    tpu.vector_store %arg6[%c0_13, %c0_14], %25 {strides = array<i32>} : memref<8x8xf32, #tpu.memory_space<vmem>>, vector<8x8xf32>,
    return
  }
  func.func @transform_0(%arg0: i32) -> (i32, i32) {
    %c0_i32 = arith.constant 0 : i32
    %c0_i32_0 = arith.constant 0 : i32
    return %arg0, %c0_i32 : i32, i32
  }
  func.func @transform_1(%arg0: i32) -> (i32, i32) {
    %c0_i32 = arith.constant 0 : i32
    %c0_i32_0 = arith.constant 0 : i32
    return %arg0, %c0_i32 : i32, i32
  }
  func.func @transform_2(%arg0: i32) -> (i32, i32) {
    %c0_i32 = arith.constant 0 : i32
    %c0_i32_0 = arith.constant 0 : i32
    %c0_i32_1 = arith.constant 0 : i32
    return %c0_i32, %c0_i32_0 : i32, i32
  }
  func.func @transform_3(%arg0: i32) -> (i32, i32) {
    %c0_i32 = arith.constant 0 : i32
    %c0_i32_0 = arith.constant 0 : i32
    %c0_i32_1 = arith.constant 0 : i32
    return %c0_i32, %c0_i32_0 : i32, i32
  }
  func.func @transform_4(%arg0: i32) -> (i32, i32) {
    %c0_i32 = arith.constant 0 : i32
    %c0_i32_0 = arith.constant 0 : i32
    %c0_i32_1 = arith.constant 0 : i32
    return %c0_i32, %c0_i32_0 : i32, i32
  }
  func.func @transform_5(%arg0: i32) -> (i32, i32) {
    %c0_i32 = arith.constant 0 : i32
    %c0_i32_0 = arith.constant 0 : i32
    return %arg0, %c0_i32 : i32, i32
  }
}

</mosaic_0001>

<llo_original>
// kernel: tpu_custom_call.1
$region0: #{tpu_custom_call.1}
  #allocation0 [shape = 'u32[]', space=smem, size = 0x4, offset = 0x4, fixed_abs, tag = 'smem constant byte address 0x4 - core index']
  #allocation1 [shape = 'u32[144,128]{1,0:T(1,128)}', space=vmem, size = 0x12000, scoped, tag = 'internal scratch']
  %s0 = inlined_call_operand.vmem [shape: f32[16,32], index: 0, kind: input, shape index: {}]
  %s1 = inlined_call_operand.vmem [shape: f32[128,32], index: 1, kind: input, shape index: {}]
  %s2 = inlined_call_operand.vmem [shape: f32[32,32], index: 2, kind: input, shape index: {}]
  %s3 = inlined_call_operand.vmem [shape: f32[32,32], index: 3, kind: input, shape index: {}]
  %s4 = inlined_call_operand.vmem [shape: f32[1,32], index: 4, kind: input, shape index: {}]
  %s5 = inlined_call_operand.vmem [shape: f32[16,8], index: 5, kind: output, shape index: {}]
  %s6 = sld [smem:[#allocation0]]
  $region53: #{tpu_custom_call.1} parent=0
    _
  %s8 = ssub.s32 1, %s6
  %s9 = scalar_select 0, %s8, %s6
  loop: start=0, step=1, limit=4
  $region2: #{tpu_custom_call.1} parent=0 // loop_pre_header
    _
  $region3: #{tpu_custom_call.1} parent=0 // loop_header
    %s11 = sphi 0, %s15
    %p12 = scmp.ge.s32.totalorder %s11, 4
    %s21 = sphi 0, %s23
    %s24 = sphi 0, %s21
    %s25 = sphi 0, %s24
    %s41 = sphi 0, %s25
    %s47 = sphi 0, %s49
    %s50 = sphi 0, %s47
    %s51 = sphi 0, %s50
    %s67 = sphi 0, %s51
    %s71 = sphi 0, %s71
    %s73 = sphi 0, %s71
    %s74 = sphi 0, %s73
    %s88 = sphi 0, %s74
    %s92 = sphi 0, %s92
    %s94 = sphi 0, %s92
    %s95 = sphi 0, %s94
    %s109 = sphi 0, %s95
    %s113 = sphi 0, %s113
    %s115 = sphi 0, %s113
    %s116 = sphi 0, %s115
    %s130 = sphi 0, %s116
    %s136 = sphi 0, %s138
    %s139 = sphi 0, %s136
    %s140 = sphi 0, %s139
    %s156 = sphi 0, %s140
  $region4: #{tpu_custom_call.1} parent=0 // loop_header_branch
    %14 = sbr.rel (%p12) target = $region8
  $region5: #{tpu_custom_call.1} parent=0 // loop_body
    %s16 = ssub.s32 %s11, 1
    %s17 = ssub.s32 %s11, 2
    %s18 = sadd.s32 %s11, 1
    %s19 = ssub.s32 %s11, %s18
    %p20 = scmp.eq.s32.totalorder %s19, 0
    %s22 = sadd.s32 %s21, 1
    %s23 = scalar_select %p20, %s21, %s22
    %p26 = pneg %p20
    %p27 = scmp.eq.s32.totalorder %s11, 1
    %p28 = por %p26, %p27
    %p29 = scmp.ne.s32.totalorder %s21, %s24
    %p30 = scmp.eq.s32.totalorder %s11, 0
    %p31 = por %p29, %p30
    %p32 = scmp.ne.s32.totalorder %s21, %s24
    %p33 = scmp.eq.s32.totalorder %s16, 1
    %p34 = por %p32, %p33
    %p35 = scmp.ne.s32.totalorder %s24, %s25
    %p36 = scmp.eq.s32.totalorder %s16, 0
    %p37 = por %p35, %p36
    %p38 = scmp.ne.s32.totalorder %s24, %s25
    %p39 = scmp.eq.s32.totalorder %s17, 1
    %p40 = por %p38, %p39
    %p42 = scmp.ne.s32.totalorder %s25, %s41
    %p43 = scmp.eq.s32.totalorder %s17, 0
    %p44 = por %p42, %p43
    %s45 = ssub.s32 %s11, %s18
    %p46 = scmp.eq.s32.totalorder %s45, 0
    %s48 = sadd.s32 %s47, 1
    %s49 = scalar_select %p46, %s47, %s48
    %p52 = pneg %p46
    %p53 = scmp.eq.s32.totalorder %s11, 1
    %p54 = por %p52, %p53
    %p55 = scmp.ne.s32.totalorder %s47, %s50
    %p56 = scmp.eq.s32.totalorder %s11, 0
    %p57 = por %p55, %p56
    %p58 = scmp.ne.s32.totalorder %s47, %s50
    %p59 = scmp.eq.s32.totalorder %s16, 1
    %p60 = por %p58, %p59
    %p61 = scmp.ne.s32.totalorder %s50, %s51
    %p62 = scmp.eq.s32.totalorder %s16, 0
    %p63 = por %p61, %p62
    %p64 = scmp.ne.s32.totalorder %s50, %s51
    %p65 = scmp.eq.s32.totalorder %s17, 1
    %p66 = por %p64, %p65
    %p68 = scmp.ne.s32.totalorder %s51, %s67
    %p69 = scmp.eq.s32.totalorder %s17, 0
    %p70 = por %p68, %p69
    %s72 = sadd.s32 %s71, 1
    %p75 = scmp.eq.s32.totalorder %s11, 1
    %p76 = scmp.ne.s32.totalorder %s71, %s73
    %p77 = scmp.eq.s32.totalorder %s11, 0
    %p78 = por %p76, %p77
    %p79 = scmp.ne.s32.totalorder %s71, %s73
    %p80 = scmp.eq.s32.totalorder %s16, 1
    %p81 = por %p79, %p80
    %p82 = scmp.ne.s32.totalorder %s73, %s74
    %p83 = scmp.eq.s32.totalorder %s16, 0
    %p84 = por %p82, %p83
    %p85 = scmp.ne.s32.totalorder %s73, %s74
    %p86 = scmp.eq.s32.totalorder %s17, 1
    %p87 = por %p85, %p86
    %p89 = scmp.ne.s32.totalorder %s74, %s88
    %p90 = scmp.eq.s32.totalorder %s17, 0
    %p91 = por %p89, %p90
    %s93 = sadd.s32 %s92, 1
    %p96 = scmp.eq.s32.totalorder %s11, 1
    %p97 = scmp.ne.s32.totalorder %s92, %s94
    %p98 = scmp.eq.s32.totalorder %s11, 0
    %p99 = por %p97, %p98
    %p100 = scmp.ne.s32.totalorder %s92, %s94
    %p101 = scmp.eq.s32.totalorder %s16, 1
    %p102 = por %p100, %p101
    %p103 = scmp.ne.s32.totalorder %s94, %s95
    %p104 = scmp.eq.s32.totalorder %s16, 0
    %p105 = por %p103, %p104
    %p106 = scmp.ne.s32.totalorder %s94, %s95
    %p107 = scmp.eq.s32.totalorder %s17, 1
    %p108 = por %p106, %p107
    %p110 = scmp.ne.s32.totalorder %s95, %s109
    %p111 = scmp.eq.s32.totalorder %s17, 0
    %p112 = por %p110, %p111
    %s114 = sadd.s32 %s113, 1
    %p117 = scmp.eq.s32.totalorder %s11, 1
    %p118 = scmp.ne.s32.totalorder %s113, %s115
    %p119 = scmp.eq.s32.totalorder %s11, 0
    %p120 = por %p118, %p119
    %p121 = scmp.ne.s32.totalorder %s113, %s115
    %p122 = scmp.eq.s32.totalorder %s16, 1
    %p123 = por %p121, %p122
    %p124 = scmp.ne.s32.totalorder %s115, %s116
    %p125 = scmp.eq.s32.totalorder %s16, 0
    %p126 = por %p124, %p125
    %p127 = scmp.ne.s32.totalorder %s115, %s116
    %p128 = scmp.eq.s32.totalorder %s17, 1
    %p129 = por %p127, %p128
    %p131 = scmp.ne.s32.totalorder %s116, %s130
    %p132 = scmp.eq.s32.totalorder %s17, 0
    %p133 = por %p131, %p132
    %s134 = ssub.s32 %s11, %s18
    %p135 = scmp.eq.s32.totalorder %s134, 0
    %s137 = sadd.s32 %s136, 1
    %s138 = scalar_select %p135, %s136, %s137
    %p141 = pneg %p135
    %p142 = scmp.eq.s32.totalorder %s11, 1
    %p143 = por %p141, %p142
    %p144 = scmp.ne.s32.totalorder %s136, %s139
    %p145 = scmp.eq.s32.totalorder %s11, 0
    %p146 = por %p144, %p145
    %p147 = scmp.ne.s32.totalorder %s136, %s139
    %p148 = scmp.eq.s32.totalorder %s16, 1
    %p149 = por %p147, %p148
    %p150 = scmp.ne.s32.totalorder %s139, %s140
    %p151 = scmp.eq.s32.totalorder %s16, 0
    %p152 = por %p150, %p151
    %p153 = scmp.ne.s32.totalorder %s139, %s140
    %p154 = scmp.eq.s32.totalorder %s17, 1
    %p155 = por %p153, %p154
    %p157 = scmp.ne.s32.totalorder %s140, %s156
    %p158 = scmp.eq.s32.totalorder %s17, 0
    %p159 = por %p157, %p158
    %p160 = scmp.le.s32.totalorder 1, %s11
    %p161 = scmp.lt.s32.totalorder %s11, 3
    %p162 = pnand %p160, %p161
    %p163 = pneg %p162
    // Predicated region
    $region9: #{tpu_custom_call.1} parent=5 // pred_check
      _
    $region10: #{tpu_custom_call.1} parent=5 // pred_check_branch
      %165 = sbr.rel (%p162) target = $region12
    $region11: #{tpu_custom_call.1} parent=5 // pred_region
      %s166 = ssub.s32 %s11, 1
      // Predicated region
      $region13: #{tpu_custom_call.1} parent=11 // pred_check
        %p167 = pneg %p84
      $region14: #{tpu_custom_call.1} parent=11 // pred_check_branch
        %169 = sbr.rel (%p167) target = $region16
      $region15: #{tpu_custom_call.1} parent=11 // pred_region
        _
      $region16: #{tpu_custom_call.1} parent=11 // pred_fallthru
        _
      // Predicated region
      $region17: #{tpu_custom_call.1} parent=11 // pred_check
        %p170 = pneg %p105
      $region18: #{tpu_custom_call.1} parent=11 // pred_check_branch
        %172 = sbr.rel (%p170) target = $region20
      $region19: #{tpu_custom_call.1} parent=11 // pred_region
        _
      $region20: #{tpu_custom_call.1} parent=11 // pred_fallthru
        _
      // Predicated region
      $region21: #{tpu_custom_call.1} parent=11 // pred_check
        %p173 = pneg %p126
      $region22: #{tpu_custom_call.1} parent=11 // pred_check_branch
        %175 = sbr.rel (%p173) target = $region24
      $region23: #{tpu_custom_call.1} parent=11 // pred_region
        _
      $region24: #{tpu_custom_call.1} parent=11 // pred_fallthru
        _
    $region12: #{tpu_custom_call.1} parent=5 // pred_fallthru
      _
    %p176 = scmp.lt.s32.totalorder %s11, 2
    // Predicated region
    $region25: #{tpu_custom_call.1} parent=5 // pred_check
      %p177 = pneg %p176
    $region26: #{tpu_custom_call.1} parent=5 // pred_check_branch
      %179 = sbr.rel (%p177) target = $region28
    $region27: #{tpu_custom_call.1} parent=5 // pred_region
      // Predicated region
      $region29: #{tpu_custom_call.1} parent=27 // pred_check
        %p180 = pneg %p31
      $region30: #{tpu_custom_call.1} parent=27 // pred_check_branch
        %182 = sbr.rel (%p180) target = $region32
      $region31: #{tpu_custom_call.1} parent=27 // pred_region
        %p183 = scmp.lt.s32.totalorder %s11, 1
        %s184 = scalar_select %p183, %s11, 1
        %s185 = smul.addr %s184, 8
        %s186 = scalar_lea.vmem %s0, %s185
      $region32: #{tpu_custom_call.1} parent=27 // pred_fallthru
        _
      // Predicated region
      $region33: #{tpu_custom_call.1} parent=27 // pred_check
        %p187 = pneg %p57
      $region34: #{tpu_custom_call.1} parent=27 // pred_check_branch
        %189 = sbr.rel (%p187) target = $region36
      $region35: #{tpu_custom_call.1} parent=27 // pred_region
        %s190 = smul.u32 8, %s11
        %p191 = scmp.lt.s32.totalorder %s190, 15
        %s192 = scalar_select %p191, %s190, 15
        %s193 = smul.addr %s192, 8
        %s194 = scalar_lea.vmem %s1, %s193
        %s195 = smul.u32 8, %s11
      $region36: #{tpu_custom_call.1} parent=27 // pred_fallthru
        _
    $region28: #{tpu_custom_call.1} parent=5 // pred_fallthru
      _
    %p196 = scmp.le.s32.totalorder 1, %s11
    %p197 = scmp.lt.s32.totalorder %s11, 3
    %p198 = pnand %p196, %p197
    %p199 = pneg %p198
    // Predicated region
    $region37: #{tpu_custom_call.1} parent=5 // pred_check
      _
    $region38: #{tpu_custom_call.1} parent=5 // pred_check_branch
      %201 = sbr.rel (%p198) target = $region40
    $region39: #{tpu_custom_call.1} parent=5 // pred_region
      %s202 = ssub.s32 %s11, 1
      %p203 = scmp.lt.s32.totalorder %s16, 1
      %s204 = scalar_select %p203, %s16, 1
      %s205 = smul.addr %s204, 8
      %s206 = scalar_lea.vmem %s0, %s205
      %p207 = pneg %p37
      %p208 = pneg %p34
      %s209 = smul.u32 8, %s16
      %p210 = scmp.lt.s32.totalorder %s209, 15
      %s211 = scalar_select %p210, %s209, 15
      %s212 = smul.addr %s211, 8
      %s213 = scalar_lea.vmem %s1, %s212
      %p214 = pneg %p63
      %p215 = pneg %p60
      %p216 = pneg %p84
      %p217 = pneg %p81
      %p218 = pneg %p105
      %p219 = pneg %p102
      %p220 = pneg %p126
      %p221 = pneg %p123
      %p222 = pneg %p152
      %p223 = pneg %p149
      %p224 = scmp.lt.s32.totalorder %s16, 1
      %s225 = scalar_select %p224, %s16, 1
      %s226 = smul.addr %s225, 8
      %s227 = scalar_lea.vmem %s5, %s226
      %p228 = scmp.lt.s32.totalorder %s16, 1
      %s229 = scalar_select %p228, %s16, 1
      %s230 = smul.addr %s229, 8
      %s231 = scalar_lea.vmem %s0, %s230
      %s232 = smul.u32 8, %s16
      %p233 = scmp.lt.s32.totalorder %s232, 15
      %s234 = scalar_select %p233, %s232, 15
      %s235 = smul.addr %s234, 8
      %s236 = scalar_lea.vmem %s1, %s235
      %s237 = smul.u32 8, %s16
      %p238 = scmp.lt.s32.totalorder %s16, 1
      %s239 = scalar_select %p238, %s16, 1
      %s240 = smul.addr %s239, 8
      %s241 = scalar_lea.vmem %s5, %s240
      %v242 = vld [vmem:[%s236] sm:$0xff]
      %v243 = vld [vmem:[%s236 + $0x8] sm:$0xff]
      %v244 = vld [vmem:[%s236 + $0x10] sm:$0xff]
      %v245 = vld [vmem:[%s236 + $0x18] sm:$0xff]
      %v246 = vld [vmem:[%s236 + $0x20] sm:$0xff]
      %v247 = vld [vmem:[%s236 + $0x28] sm:$0xff]
      %v248 = vld [vmem:[%s236 + $0x30] sm:$0xff]
      %v249 = vld [vmem:[%s236 + $0x38] sm:$0xff]
      %v250 = vld [vmem:[%s231] sm:$0xff]
      %v251 = vld [vmem:[%s3] sm:$0xff]
      %v252 = vld [vmem:[%s3 + $0x8] sm:$0xff]
      %v253 = vld [vmem:[%s3 + $0x10] sm:$0xff]
      %v254 = vld [vmem:[%s3 + $0x18] sm:$0xff]
      %v255 = vld [vmem:[%s2] sm:$0xff]
      %v256 = vld [vmem:[%s2 + $0x8] sm:$0xff]
      %v257 = vld [vmem:[%s2 + $0x10] sm:$0xff]
      %v258 = vld [vmem:[%s2 + $0x18] sm:$0xff]
      %v259 = vld [vmem:[%s4] sm:$0x1]
      %vm260 = vcmask 261120
      %v262 = vsel %vm260, %v242, 0
      %v265 = vsel %vm260, %v243, 0
      %v268 = vsel %vm260, %v244, 0
      %v271 = vsel %vm260, %v245, 0
      %v274 = vsel %vm260, %v246, 0
      %v277 = vsel %vm260, %v247, 0
      %v280 = vsel %vm260, %v248, 0
      %v283 = vsel %vm260, %v249, 0
      %285 = vmatprep.subr.mxu0 0.0
      %286 = vmatpush1.msra.mxu0 %v251
      %287 = vmatprep.subr.mxu0 0.0
      %288 = vmatpush1.msra.mxu0 %v252
      %289 = vmatprep.subr.mxu0 0.0
      %290 = vmatpush1.msra.mxu0 %v253
      %291 = vmatprep.subr.mxu0 0.0
      %292 = vmatpush1.msra.mxu0 %v254
      %293 = vmatprep.subr.mxu0 0.0
      %294 = vmatpush1.msra.mxu0 0.0
      %295 = vmatprep.subr.mxu0 0.0
      %296 = vmatpush1.msra.mxu0 0.0
      %297 = vmatprep.subr.mxu0 0.0
      %298 = vmatpush1.msra.mxu0 0.0
      %299 = vmatprep.subr.mxu0 0.0
      %300 = vmatpush1.msra.mxu0 0.0
      %301 = vmatprep.subr.mxu0 0.0
      %302 = vmatpush1.msra.mxu0 0.0
      %303 = vmatprep.subr.mxu0 0.0
      %304 = vmatpush1.msra.mxu0 0.0
      %305 = vmatprep.subr.mxu0 0.0
      %306 = vmatpush1.msra.mxu0 0.0
      %307 = vmatprep.subr.mxu0 0.0
      %308 = vmatpush1.msra.mxu0 0.0
      %309 = vmatprep.subr.mxu0 0.0
      %310 = vmatpush1.msra.mxu0 0.0
      %311 = vmatprep.subr.mxu0 0.0
      %312 = vmatpush1.msra.mxu0 0.0
      %313 = vmatprep.subr.mxu0 0.0
      %314 = vmatpush1.msra.mxu0 0.0
      %315 = vmatprep.subr.mxu0 0.0
      %316 = vmatpush1.msra.mxu0 0.0
      %317 = vmatprep.subr.mxu0 0.0
      %318 = vmatpush1.msra.mxu0 0.0
      %319 = vmatprep.subr.mxu0 0.0
      %320 = vmatpush1.msra.mxu0 0.0
      %321 = vmatprep.subr.mxu0 0.0
      %322 = vmatpush1.msra.mxu0 0.0
      %323 = vmatprep.subr.mxu0 0.0
      %324 = vmatpush1.msra.mxu0 0.0
      %325 = vmatprep.subr.mxu0 0.0
      %326 = vmatpush1.msra.mxu0 0.0
      %327 = vmatprep.subr.mxu0 0.0
      %328 = vmatpush1.msra.mxu0 0.0
      %329 = vmatprep.subr.mxu0 0.0
      %330 = vmatpush1.msra.mxu0 0.0
      %331 = vmatprep.subr.mxu0 0.0
      %332 = vmatpush1.msra.mxu0 0.0
      %333 = vmatprep.subr.mxu0 0.0
      %334 = vmatpush1.msra.mxu0 0.0
      %335 = vmatprep.subr.mxu0 0.0
      %336 = vmatpush1.msra.mxu0 0.0
      %337 = vmatprep.subr.mxu0 0.0
      %338 = vmatpush1.msra.mxu0 0.0
      %339 = vmatprep.subr.mxu0 0.0
      %340 = vmatpush1.msra.mxu0 0.0
      %341 = vmatprep.subr.mxu0 0.0
      %342 = vmatpush1.msra.mxu0 0.0
      %343 = vmatprep.subr.mxu0 0.0
      %344 = vmatpush1.msra.mxu0 0.0
      %345 = vmatprep.subr.mxu0 0.0
      %346 = vmatpush1.msra.mxu0 0.0
      %347 = vmatprep.subr.mxu0 0.0
      %348 = vmatpush1.msra.mxu0 0.0
      %349 = vmatprep.mubr.f32.mxu0 0.0
      %350 = vmatmul.mubr.f32.gmra.mrb[0].mxu0 %v262
      %v351 = vpop.f32.mrb[0].mxu0
      %v352 = vadd.f32 0.0, %v351
      %v353 = vpop.f32.mrb[0].mxu0
      %354 = vmatprep.mubr.f32.mxu0 0.0
      %355 = vmatmul.mubr.f32.gmra.mrb[0].mxu0 %v265
      %v356 = vpop.f32.mrb[0].mxu0
      %v357 = vadd.f32 0.0, %v356
      %v358 = vpop.f32.mrb[0].mxu0
      %359 = vmatprep.mubr.f32.mxu0 0.0
      %360 = vmatmul.mubr.f32.gmra.mrb[0].mxu0 %v268
      %v361 = vpop.f32.mrb[0].mxu0
      %v362 = vadd.f32 0.0, %v361
      %v363 = vpop.f32.mrb[0].mxu0
      %364 = vmatprep.mubr.f32.mxu0 0.0
      %365 = vmatmul.mubr.f32.gmra.mrb[0].mxu0 %v271
      %v366 = vpop.f32.mrb[0].mxu0
      %v367 = vadd.f32 0.0, %v366
      %v368 = vpop.f32.mrb[0].mxu0
      %369 = vmatprep.mubr.f32.mxu0 0.0
      %370 = vmatmul.mubr.f32.gmra.mrb[0].mxu0 %v274
      %v371 = vpop.f32.mrb[0].mxu0
      %v372 = vadd.f32 0.0, %v371
      %v373 = vpop.f32.mrb[0].mxu0
      %374 = vmatprep.mubr.f32.mxu0 0.0
      %375 = vmatmul.mubr.f32.gmra.mrb[0].mxu0 %v277
      %v376 = vpop.f32.mrb[0].mxu0
      %v377 = vadd.f32 0.0, %v376
      %v378 = vpop.f32.mrb[0].mxu0
      %379 = vmatprep.mubr.f32.mxu0 0.0
      %380 = vmatmul.mubr.f32.gmra.mrb[0].mxu0 %v280
      %v381 = vpop.f32.mrb[0].mxu0
      %v382 = vadd.f32 0.0, %v381
      %v383 = vpop.f32.mrb[0].mxu0
      %384 = vmatprep.mubr.f32.mxu0 0.0
      %385 = vmatmul.mubr.f32.gmra.mrb[0].mxu0 %v283
      %v386 = vpop.f32.mrb[0].mxu0
      %v387 = vadd.f32 0.0, %v386
      %v388 = vpop.f32.mrb[0].mxu0
      %389 = vdwg.mxu0
      %v391 = vsel %vm260, %v250, 0
      %393 = vmatprep.subr.mxu0 0.0
      %394 = vmatpush1.msra.mxu0 %v255
      %395 = vmatprep.subr.mxu0 0.0
      %396 = vmatpush1.msra.mxu0 %v256
      %397 = vmatprep.subr.mxu0 0.0
      %398 = vmatpush1.msra.mxu0 %v257
      %399 = vmatprep.subr.mxu0 0.0
      %400 = vmatpush1.msra.mxu0 %v258
      %401 = vmatprep.subr.mxu0 0.0
      %402 = vmatpush1.msra.mxu0 0.0
      %403 = vmatprep.subr.mxu0 0.0
      %404 = vmatpush1.msra.mxu0 0.0
      %405 = vmatprep.subr.mxu0 0.0
      %406 = vmatpush1.msra.mxu0 0.0
      %407 = vmatprep.subr.mxu0 0.0
      %408 = vmatpush1.msra.mxu0 0.0
      %409 = vmatprep.subr.mxu0 0.0
      %410 = vmatpush1.msra.mxu0 0.0
      %411 = vmatprep.subr.mxu0 0.0
      %412 = vmatpush1.msra.mxu0 0.0
      %413 = vmatprep.subr.mxu0 0.0
      %414 = vmatpush1.msra.mxu0 0.0
      %415 = vmatprep.subr.mxu0 0.0
      %416 = vmatpush1.msra.mxu0 0.0
      %417 = vmatprep.subr.mxu0 0.0
      %418 = vmatpush1.msra.mxu0 0.0
      %419 = vmatprep.subr.mxu0 0.0
      %420 = vmatpush1.msra.mxu0 0.0
      %421 = vmatprep.subr.mxu0 0.0
      %422 = vmatpush1.msra.mxu0 0.0
      %423 = vmatprep.subr.mxu0 0.0
      %424 = vmatpush1.msra.mxu0 0.0
      %425 = vmatprep.subr.mxu0 0.0
      %426 = vmatpush1.msra.mxu0 0.0
      %427 = vmatprep.subr.mxu0 0.0
      %428 = vmatpush1.msra.mxu0 0.0
      %429 = vmatprep.subr.mxu0 0.0
      %430 = vmatpush1.msra.mxu0 0.0
      %431 = vmatprep.subr.mxu0 0.0
      %432 = vmatpush1.msra.mxu0 0.0
      %433 = vmatprep.subr.mxu0 0.0
      %434 = vmatpush1.msra.mxu0 0.0
      %435 = vmatprep.subr.mxu0 0.0
      %436 = vmatpush1.msra.mxu0 0.0
      %437 = vmatprep.subr.mxu0 0.0
      %438 = vmatpush1.msra.mxu0 0.0
      %439 = vmatprep.subr.mxu0 0.0
      %440 = vmatpush1.msra.mxu0 0.0
      %441 = vmatprep.subr.mxu0 0.0
      %442 = vmatpush1.msra.mxu0 0.0
      %443 = vmatprep.subr.mxu0 0.0
      %444 = vmatpush1.msra.mxu0 0.0
      %445 = vmatprep.subr.mxu0 0.0
      %446 = vmatpush1.msra.mxu0 0.0
      %447 = vmatprep.subr.mxu0 0.0
      %448 = vmatpush1.msra.mxu0 0.0
      %449 = vmatprep.subr.mxu0 0.0
      %450 = vmatpush1.msra.mxu0 0.0
      %451 = vmatprep.subr.mxu0 0.0
      %452 = vmatpush1.msra.mxu0 0.0
      %453 = vmatprep.subr.mxu0 0.0
      %454 = vmatpush1.msra.mxu0 0.0
      %455 = vmatprep.subr.mxu0 0.0
      %456 = vmatpush1.msra.mxu0 0.0
      %457 = vmatprep.mubr.f32.mxu0 0.0
      %458 = vmatmul.mubr.f32.gmra.mrb[0].mxu0 %v391
      %v459 = vpop.f32.mrb[0].mxu0
      %v460 = vadd.f32 0.0, %v459
      %v461 = vpop.f32.mrb[0].mxu0
      %462 = vdwg.mxu0
      %v464 = vcombine.high %v460, %v460
      %v466 = vunpack.c.l.s4 1966171168
      %v467 = vunpack.c.0.s8 %v466
      %v468 = vlaneseq
      %v469 = vshrl.u32 %v468, 7
      %v470 = vsub.s32 %v467, %v469
      %v471 = vrot.slane %v460, %v470
      %v473 = vunpack.c.l.s4 1966171168
      %v474 = vunpack.c.0.s8 %v473
      %v475 = vlaneseq
      %v476 = vshrl.u32 %v475, 7
      %v477 = vsub.s32 %v474, %v476
      %v478 = vrot.slane %v464, %v477
      %v479 = vcombine.high %v471, %v471
      %v480 = vcombine.high %v478, %v478
      %v482 = vunpack.c.l.s4 1966171168
      %v483 = vunpack.c.0.s8 %v482
      %v484 = vlaneseq
      %v485 = vshrl.u32 %v484, 7
      %v486 = vsub.s32 %v483, %v485
      %v487 = vrot.slane %v471, %v486
      %v489 = vunpack.c.l.s4 1966171168
      %v490 = vunpack.c.0.s8 %v489
      %v491 = vlaneseq
      %v492 = vshrl.u32 %v491, 7
      %v493 = vsub.s32 %v490, %v492
      %v494 = vrot.slane %v478, %v493
      %v496 = vunpack.c.l.s4 1966171168
      %v497 = vunpack.c.0.s8 %v496
      %v498 = vlaneseq
      %v499 = vshrl.u32 %v498, 7
      %v500 = vsub.s32 %v497, %v499
      %v501 = vrot.slane %v479, %v500
      %v503 = vunpack.c.l.s4 1966171168
      %v504 = vunpack.c.0.s8 %v503
      %v505 = vlaneseq
      %v506 = vshrl.u32 %v505, 7
      %v507 = vsub.s32 %v504, %v506
      %v508 = vrot.slane %v480, %v507
      %v509 = vcombine.high %v487, %v487
      %v510 = vcombine.high %v494, %v494
      %v511 = vcombine.high %v501, %v501
      %v512 = vcombine.high %v508, %v508
      %v513 = vlaneseq
      %v514 = vshrl.u32 %v513, 7
      %v515 = vsub.s32 0, %v514
      %v516 = vrot.slane %v487, %v515
      %v517 = vlaneseq
      %v518 = vshrl.u32 %v517, 7
      %v519 = vsub.s32 0, %v518
      %v520 = vrot.slane %v501, %v519
      %v521 = vlaneseq
      %v522 = vshrl.u32 %v521, 7
      %v523 = vsub.s32 0, %v522
      %v524 = vrot.slane %v509, %v523
      %v525 = vlaneseq
      %v526 = vshrl.u32 %v525, 7
      %v527 = vsub.s32 0, %v526
      %v528 = vrot.slane %v511, %v527
      %v529 = vlaneseq
      %v530 = vshrl.u32 %v529, 7
      %v531 = vsub.s32 0, %v530
      %v532 = vrot.slane %v494, %v531
      %v533 = vlaneseq
      %v534 = vshrl.u32 %v533, 7
      %v535 = vsub.s32 0, %v534
      %v536 = vrot.slane %v508, %v535
      %v537 = vlaneseq
      %v538 = vshrl.u32 %v537, 7
      %v539 = vsub.s32 0, %v538
      %v540 = vrot.slane %v510, %v539
      %v541 = vlaneseq
      %v542 = vshrl.u32 %v541, 7
      %v543 = vsub.s32 0, %v542
      %v544 = vrot.slane %v512, %v543
      %v553 = vadd.f32 %v352, %v516
      %v554 = vadd.f32 %v357, %v520
      %v555 = vadd.f32 %v362, %v524
      %v556 = vadd.f32 %v367, %v528
      %v557 = vadd.f32 %v372, %v532
      %v558 = vadd.f32 %v377, %v536
      %v559 = vadd.f32 %v382, %v540
      %v560 = vadd.f32 %v387, %v544
      %v561 = vtanh.pop %v553
      %v562 = vtanh.pop %v554
      %v563 = vtanh.pop %v555
      %v564 = vtanh.pop %v556
      %v565 = vtanh.pop %v557
      %v566 = vtanh.pop %v558
      %v567 = vtanh.pop %v559
      %v568 = vtanh.pop %v560
      %v570 = vlaneseq
      %v571 = vshrl.u32 %v570, 7
      %v572 = vsub.s32 0, %v571
      %v573 = vrot.slane %v259, %v572
      %v575 = vmul.f32 %v561, %v573
      %v576 = vmul.f32 %v562, %v573
      %v577 = vmul.f32 %v563, %v573
      %v578 = vmul.f32 %v564, %v573
      %v579 = vmul.f32 %v565, %v573
      %v580 = vmul.f32 %v566, %v573
      %v581 = vmul.f32 %v567, %v573
      %v582 = vmul.f32 %v568, %v573
      %v583 = vsel %vm260, %v575, 0.0
      %584 = vadd.xlane.f32.xlu0 %v583
      %v585 = vpop.xlane.xlu0 %584
      %v586 = vsel %vm260, %v576, 0.0
      %587 = vadd.xlane.f32.xlu0 %v586
      %v588 = vpop.xlane.xlu0 %587
      %v589 = vsel %vm260, %v577, 0.0
      %590 = vadd.xlane.f32.xlu0 %v589
      %v591 = vpop.xlane.xlu0 %590
      %v592 = vsel %vm260, %v578, 0.0
      %593 = vadd.xlane.f32.xlu0 %v592
      %v594 = vpop.xlane.xlu0 %593
      %v595 = vsel %vm260, %v579, 0.0
      %596 = vadd.xlane.f32.xlu0 %v595
      %v597 = vpop.xlane.xlu0 %596
      %v598 = vsel %vm260, %v580, 0.0
      %599 = vadd.xlane.f32.xlu0 %v598
      %v600 = vpop.xlane.xlu0 %599
      %v601 = vsel %vm260, %v581, 0.0
      %602 = vadd.xlane.f32.xlu0 %v601
      %v603 = vpop.xlane.xlu0 %602
      %v604 = vsel %vm260, %v582, 0.0
      %605 = vadd.xlane.f32.xlu0 %v604
      %v606 = vpop.xlane.xlu0 %605
      %v615 = vlaneseq
      %v616 = vand.u32 %v615, 127
      %v617 = vlaneseq
      %v618 = vshrl.u32 %v617, 7
      %v619 = vsub.s32 %v616, %v618
      %v620 = vrot.slane %v585, %v619
      %v621 = vlaneseq
      %v622 = vshrl.u32 %v621, 7
      %v623 = vsub.s32 %v616, %v622
      %v624 = vrot.slane %v588, %v623
      %v625 = vlaneseq
      %v626 = vshrl.u32 %v625, 7
      %v627 = vsub.s32 %v616, %v626
      %v628 = vrot.slane %v591, %v627
      %v629 = vlaneseq
      %v630 = vshrl.u32 %v629, 7
      %v631 = vsub.s32 %v616, %v630
      %v632 = vrot.slane %v594, %v631
      %v633 = vlaneseq
      %v634 = vshrl.u32 %v633, 7
      %v635 = vsub.s32 %v616, %v634
      %v636 = vrot.slane %v597, %v635
      %v637 = vlaneseq
      %v638 = vshrl.u32 %v637, 7
      %v639 = vsub.s32 %v616, %v638
      %v640 = vrot.slane %v600, %v639
      %v641 = vlaneseq
      %v642 = vshrl.u32 %v641, 7
      %v643 = vsub.s32 %v616, %v642
      %v644 = vrot.slane %v603, %v643
      %v645 = vlaneseq
      %v646 = vshrl.u32 %v645, 7
      %v647 = vsub.s32 %v616, %v646
      %v648 = vrot.slane %v606, %v647
      %vm649 = vcmask 1041409
      %v650 = vsel %vm649, %v624, %v620
      %vm651 = vcmask 1042434
      %v652 = vsel %vm651, %v628, %v650
      %vm653 = vcmask 1043459
      %v654 = vsel %vm653, %v632, %v652
      %vm655 = vcmask 1044484
      %v656 = vsel %vm655, %v636, %v654
      %vm657 = vcmask 1045509
      %v658 = vsel %vm657, %v640, %v656
      %vm659 = vcmask 1046534
      %v660 = vsel %vm659, %v644, %v658
      %vm661 = vcmask 1047559
      %v662 = vsel %vm661, %v648, %v660
      %vm664 = vcmask 64512
      %v665 = vsel %vm664, %v662, -inf
      %666 = vmax.xlane.f32.xlu0 %v665
      %v667 = vpop.xlane.xlu0 %666
      %v669 = vlaneseq
      %v670 = vshrl.u32 %v669, 7
      %v671 = vsub.s32 0, %v670
      %v672 = vrot.slane %v667, %v671
      %v673 = vlaneseq
      %v674 = vshrl.u32 %v673, 7
      %v675 = vsub.s32 1, %v674
      %v676 = vrot.slane %v667, %v675
      %v677 = vlaneseq
      %v678 = vshrl.u32 %v677, 7
      %v679 = vsub.s32 2, %v678
      %v680 = vrot.slane %v667, %v679
      %v681 = vlaneseq
      %v682 = vshrl.u32 %v681, 7
      %v683 = vsub.s32 3, %v682
      %v684 = vrot.slane %v667, %v683
      %v685 = vlaneseq
      %v686 = vshrl.u32 %v685, 7
      %v687 = vsub.s32 4, %v686
      %v688 = vrot.slane %v667, %v687
      %v689 = vlaneseq
      %v690 = vshrl.u32 %v689, 7
      %v691 = vsub.s32 5, %v690
      %v692 = vrot.slane %v667, %v691
      %v693 = vlaneseq
      %v694 = vshrl.u32 %v693, 7
      %v695 = vsub.s32 6, %v694
      %v696 = vrot.slane %v667, %v695
      %v697 = vlaneseq
      %v698 = vshrl.u32 %v697, 7
      %v699 = vsub.s32 7, %v698
      %v700 = vrot.slane %v667, %v699
      %v709 = vsub.f32 %v585, %v672
      %v710 = vsub.f32 %v588, %v676
      %v711 = vsub.f32 %v591, %v680
      %v712 = vsub.f32 %v594, %v684
      %v713 = vsub.f32 %v597, %v688
      %v714 = vsub.f32 %v600, %v692
      %v715 = vsub.f32 %v603, %v696
      %v716 = vsub.f32 %v606, %v700
      %v717 = vmul.f32 %v709, 1.442695
      %v718 = vpow.pop %v717
      %v719 = vmul.f32 %v710, 1.442695
      %v720 = vpow.pop %v719
      %v721 = vmul.f32 %v711, 1.442695
      %v722 = vpow.pop %v721
      %v723 = vmul.f32 %v712, 1.442695
      %v724 = vpow.pop %v723
      %v725 = vmul.f32 %v713, 1.442695
      %v726 = vpow.pop %v725
      %v727 = vmul.f32 %v714, 1.442695
      %v728 = vpow.pop %v727
      %v729 = vmul.f32 %v715, 1.442695
      %v730 = vpow.pop %v729
      %v731 = vmul.f32 %v716, 1.442695
      %v732 = vpow.pop %v731
      %741 = vset.pattern.permute.xlu0 0
      %742 = vperm.xlu0 %741, %v718
      %v743 = vpop.permute.xlu0 %742
      %744 = vset.pattern.permute.xlu0 0
      %745 = vperm.xlu0 %744, %v720
      %v746 = vpop.permute.xlu0 %745
      %747 = vset.pattern.permute.xlu0 0
      %748 = vperm.xlu0 %747, %v722
      %v749 = vpop.permute.xlu0 %748
      %750 = vset.pattern.permute.xlu0 0
      %751 = vperm.xlu0 %750, %v724
      %v752 = vpop.permute.xlu0 %751
      %753 = vset.pattern.permute.xlu0 0
      %754 = vperm.xlu0 %753, %v726
      %v755 = vpop.permute.xlu0 %754
      %756 = vset.pattern.permute.xlu0 0
      %757 = vperm.xlu0 %756, %v728
      %v758 = vpop.permute.xlu0 %757
      %759 = vset.pattern.permute.xlu0 0
      %760 = vperm.xlu0 %759, %v730
      %v761 = vpop.permute.xlu0 %760
      %762 = vset.pattern.permute.xlu0 0
      %763 = vperm.xlu0 %762, %v732
      %v764 = vpop.permute.xlu0 %763
      %v765 = vlaneseq
      %v766 = vshrl.u32 %v765, 7
      %v767 = vsub.s32 %v616, %v766
      %v768 = vrot.slane %v743, %v767
      %v769 = vlaneseq
      %v770 = vshrl.u32 %v769, 7
      %v771 = vsub.s32 %v616, %v770
      %v772 = vrot.slane %v746, %v771
      %v773 = vlaneseq
      %v774 = vshrl.u32 %v773, 7
      %v775 = vsub.s32 %v616, %v774
      %v776 = vrot.slane %v749, %v775
      %v777 = vlaneseq
      %v778 = vshrl.u32 %v777, 7
      %v779 = vsub.s32 %v616, %v778
      %v780 = vrot.slane %v752, %v779
      %v781 = vlaneseq
      %v782 = vshrl.u32 %v781, 7
      %v783 = vsub.s32 %v616, %v782
      %v784 = vrot.slane %v755, %v783
      %v785 = vlaneseq
      %v786 = vshrl.u32 %v785, 7
      %v787 = vsub.s32 %v616, %v786
      %v788 = vrot.slane %v758, %v787
      %v789 = vlaneseq
      %v790 = vshrl.u32 %v789, 7
      %v791 = vsub.s32 %v616, %v790
      %v792 = vrot.slane %v761, %v791
      %v793 = vlaneseq
      %v794 = vshrl.u32 %v793, 7
      %v795 = vsub.s32 %v616, %v794
      %v796 = vrot.slane %v764, %v795
      %v797 = vsel %vm649, %v772, %v768
      %v798 = vsel %vm651, %v776, %v797
      %v799 = vsel %vm653, %v780, %v798
      %v800 = vsel %vm655, %v784, %v799
      %v801 = vsel %vm657, %v788, %v800
      %v802 = vsel %vm659, %v792, %v801
      %v803 = vsel %vm661, %v796, %v802
      %v805 = vsel %vm664, %v803, 0.0
      %806 = vadd.xlane.f32.xlu0 %v805
      %v807 = vpop.xlane.xlu0 %806
      %v808 = vrcp.pop %v807
      %v810 = vlaneseq
      %v811 = vshrl.u32 %v810, 7
      %v812 = vsub.s32 0, %v811
      %v813 = vrot.slane %v808, %v812
      %v814 = vlaneseq
      %v815 = vshrl.u32 %v814, 7
      %v816 = vsub.s32 1, %v815
      %v817 = vrot.slane %v808, %v816
      %v818 = vlaneseq
      %v819 = vshrl.u32 %v818, 7
      %v820 = vsub.s32 2, %v819
      %v821 = vrot.slane %v808, %v820
      %v822 = vlaneseq
      %v823 = vshrl.u32 %v822, 7
      %v824 = vsub.s32 3, %v823
      %v825 = vrot.slane %v808, %v824
      %v826 = vlaneseq
      %v827 = vshrl.u32 %v826, 7
      %v828 = vsub.s32 4, %v827
      %v829 = vrot.slane %v808, %v828
      %v830 = vlaneseq
      %v831 = vshrl.u32 %v830, 7
      %v832 = vsub.s32 5, %v831
      %v833 = vrot.slane %v808, %v832
      %v834 = vlaneseq
      %v835 = vshrl.u32 %v834, 7
      %v836 = vsub.s32 6, %v835
      %v837 = vrot.slane %v808, %v836
      %v838 = vlaneseq
      %v839 = vshrl.u32 %v838, 7
      %v840 = vsub.s32 7, %v839
      %v841 = vrot.slane %v808, %v840
      %v850 = vmul.f32 %v718, %v813
      %v851 = vmul.f32 %v720, %v817
      %v852 = vmul.f32 %v722, %v821
      %v853 = vmul.f32 %v724, %v825
      %v854 = vmul.f32 %v726, %v829
      %v855 = vmul.f32 %v728, %v833
      %v856 = vmul.f32 %v730, %v837
      %v857 = vmul.f32 %v732, %v841
      %866 = vset.pattern.permute.xlu0 0
      %867 = vperm.xlu0 %866, %v850
      %v868 = vpop.permute.xlu0 %867
      %869 = vset.pattern.permute.xlu0 0
      %870 = vperm.xlu0 %869, %v851
      %v871 = vpop.permute.xlu0 %870
      %872 = vset.pattern.permute.xlu0 0
      %873 = vperm.xlu0 %872, %v852
      %v874 = vpop.permute.xlu0 %873
      %875 = vset.pattern.permute.xlu0 0
      %876 = vperm.xlu0 %875, %v853
      %v877 = vpop.permute.xlu0 %876
      %878 = vset.pattern.permute.xlu0 0
      %879 = vperm.xlu0 %878, %v854
      %v880 = vpop.permute.xlu0 %879
      %881 = vset.pattern.permute.xlu0 0
      %882 = vperm.xlu0 %881, %v855
      %v883 = vpop.permute.xlu0 %882
      %884 = vset.pattern.permute.xlu0 0
      %885 = vperm.xlu0 %884, %v856
      %v886 = vpop.permute.xlu0 %885
      %887 = vset.pattern.permute.xlu0 0
      %888 = vperm.xlu0 %887, %v857
      %v889 = vpop.permute.xlu0 %888
      %v890 = vlaneseq
      %v891 = vshrl.u32 %v890, 7
      %v892 = vsub.s32 %v616, %v891
      %v893 = vrot.slane %v868, %v892
      %v894 = vlaneseq
      %v895 = vshrl.u32 %v894, 7
      %v896 = vsub.s32 %v616, %v895
      %v897 = vrot.slane %v871, %v896
      %v898 = vlaneseq
      %v899 = vshrl.u32 %v898, 7
      %v900 = vsub.s32 %v616, %v899
      %v901 = vrot.slane %v874, %v900
      %v902 = vlaneseq
      %v903 = vshrl.u32 %v902, 7
      %v904 = vsub.s32 %v616, %v903
      %v905 = vrot.slane %v877, %v904
      %v906 = vlaneseq
      %v907 = vshrl.u32 %v906, 7
      %v908 = vsub.s32 %v616, %v907
      %v909 = vrot.slane %v880, %v908
      %v910 = vlaneseq
      %v911 = vshrl.u32 %v910, 7
      %v912 = vsub.s32 %v616, %v911
      %v913 = vrot.slane %v883, %v912
      %v914 = vlaneseq
      %v915 = vshrl.u32 %v914, 7
      %v916 = vsub.s32 %v616, %v915
      %v917 = vrot.slane %v886, %v916
      %v918 = vlaneseq
      %v919 = vshrl.u32 %v918, 7
      %v920 = vsub.s32 %v616, %v919
      %v921 = vrot.slane %v889, %v920
      %v922 = vsel %vm649, %v897, %v893
      %v923 = vsel %vm651, %v901, %v922
      %v924 = vsel %vm653, %v905, %v923
      %v925 = vsel %vm655, %v909, %v924
      %v926 = vsel %vm657, %v913, %v925
      %v927 = vsel %vm659, %v917, %v926
      %v928 = vsel %vm661, %v921, %v927
      %930 = vst.msk [vmem:[%s241] sm:$0xff] %vm664, %v928
      %p931 = scmp.lt.s32.totalorder %s16, 1
      %s932 = scalar_select %p931, %s16, 1
      %s933 = smul.addr %s932, 8
      %s934 = scalar_lea.vmem %s5, %s933
      // Predicated region
      $region41: #{tpu_custom_call.1} parent=39 // pred_check
        %p935 = pneg %p149
      $region42: #{tpu_custom_call.1} parent=39 // pred_check_branch
        %937 = sbr.rel (%p935) target = $region44
      $region43: #{tpu_custom_call.1} parent=39 // pred_region
        _
      $region44: #{tpu_custom_call.1} parent=39 // pred_fallthru
        _
    $region40: #{tpu_custom_call.1} parent=5 // pred_fallthru
      _
    %p938 = scmp.le.s32.totalorder 2, %s11
    // Predicated region
    $region45: #{tpu_custom_call.1} parent=5 // pred_check
      %p939 = pneg %p938
    $region46: #{tpu_custom_call.1} parent=5 // pred_check_branch
      %941 = sbr.rel (%p939) target = $region48
    $region47: #{tpu_custom_call.1} parent=5 // pred_region
      %s942 = ssub.s32 %s11, 2
      // Predicated region
      $region49: #{tpu_custom_call.1} parent=47 // pred_check
        %p943 = pneg %p155
      $region50: #{tpu_custom_call.1} parent=47 // pred_check_branch
        %945 = sbr.rel (%p943) target = $region52
      $region51: #{tpu_custom_call.1} parent=47 // pred_region
        %p946 = scmp.lt.s32.totalorder %s17, 1
        %s947 = scalar_select %p946, %s17, 1
        %s948 = smul.addr %s947, 8
        %s949 = scalar_lea.vmem %s5, %s948
      $region52: #{tpu_custom_call.1} parent=47 // pred_fallthru
        _
    $region48: #{tpu_custom_call.1} parent=5 // pred_fallthru
      _
  $region6: #{tpu_custom_call.1} parent=0 // loop_footer
    %s15 = sadd.s32 1, %s11
  $region7: #{tpu_custom_call.1} parent=0 // loop_footer_branch
    %10 = sbr.rel target = $region3
  $region8: #{tpu_custom_call.1} parent=0 // loop_exit
    _

</llo_original>
